<compile_context>
chip_gen: v7x
topology: tpu7x:2x2x1
jax: 0.10.0
libtpu: 0.0.40
codegen_flags: <defaults>
</compile_context>

<pallas_src>
import functools
import math

import jax
import jax.numpy as jnp
from jax.experimental import pallas as pl
from jax.experimental.pallas import tpu as pltpu

_MIB = 1024 * 1024
_LANE_MULT = 256  # v6e/v7x MXU is 2x256x256; harmless extra padding on v5e (4x128x128)


def _round_up(x: int, m: int) -> int:
    return ((x + m - 1) // m) * m


def _sublane_multiple(dtype) -> int:
    itemsize = jnp.dtype(dtype).itemsize
    if itemsize >= 4:
        return 8
    if itemsize == 2:
        return 16
    return 32


def _vmem_capacity_bytes() -> int:
    try:
        return int(pltpu.get_tpu_info().vmem_capacity_bytes)
    except Exception:
        return 64 * _MIB  # conservative (v7x per-TC budget)


def _make_kernel(has_bias: bool, acc_into_out: bool):
    """Build the (tm, tn) output-tile kernel, accumulating over the K grid axis.

    x_ref: (tm, tk), w_ref: (tk, tn)  (weight already in (in, out) layout, so
    jnp.dot needs no transpose), b_ref: (1, tn) when present.
    """
    if acc_into_out:
        # Output dtype is f32: accumulate directly into the resident output block.
        def kernel(x_ref, w_ref, *rest):
            if has_bias:
                b_ref, o_ref = rest
            else:
                (o_ref,) = rest
            k = pl.program_id(2)

            @pl.when(k == 0)
            def _init():
                o_ref[...] = jnp.zeros_like(o_ref)

            o_ref[...] += jnp.dot(
                x_ref[...], w_ref[...], preferred_element_type=jnp.float32
            )

            if has_bias:
                @pl.when(k == pl.num_programs(2) - 1)
                def _fin():
                    o_ref[...] += b_ref[...].astype(o_ref.dtype)

        return kernel

    # Narrow output dtype (bf16/...): accumulate in an f32 VMEM scratch.
    def kernel(x_ref, w_ref, *rest):
        if has_bias:
            b_ref, o_ref, acc_ref = rest
        else:
            o_ref, acc_ref = rest
        k = pl.program_id(2)

        @pl.when(k == 0)
        def _init():
            acc_ref[...] = jnp.zeros_like(acc_ref)

        acc_ref[...] += jnp.dot(
            x_ref[...], w_ref[...], preferred_element_type=jnp.float32
        )

        @pl.when(k == pl.num_programs(2) - 1)
        def _fin():
            r = acc_ref[...]
            if has_bias:
                r = r + b_ref[...].astype(jnp.float32)
            o_ref[...] = r.astype(o_ref.dtype)

    return kernel


def _resolve_tiles(M, N, K, in_dtype, out_dtype, tm, tn, tk):
    """Generation-aware tile sizes + vmem limit, derived from the VMEM budget."""
    vmem_cap = _vmem_capacity_bytes()
    big_vmem = vmem_cap >= 100 * _MIB  # v5e / v6e have 128 MiB; v7x has 64 MiB/TC

    in_sz = jnp.dtype(in_dtype).itemsize
    out_sz = jnp.dtype(out_dtype).itemsize
    sub_mult = _sublane_multiple(in_dtype)

    if tm is None:
        tm = 1024 if big_vmem else 512
    if tn is None:
        tn = 1024 if big_vmem else 512
    if tk is None:
        tk = 1024 if big_vmem else 512

    # Clamp to the (padded) problem: sublane multiple for M, MXU/lane multiple for N/K.
    tm = min(tm, _round_up(M, sub_mult))
    tn = min(tn, _round_up(N, _LANE_MULT))
    tk = min(tk, _round_up(K, _LANE_MULT))

    use_scratch = jnp.dtype(out_dtype) != jnp.dtype(jnp.float32)
    w_bufs = 3 if _round_up(M, sub_mult) <= 256 else 2  # deeper prefetch when skinny-M

    def need(tm_, tn_, tk_):
        b = 2 * tm_ * tk_ * in_sz          # x double-buffer
        b += w_bufs * tk_ * tn_ * in_sz    # weight buffers
        b += 2 * tm_ * tn_ * out_sz        # output double-buffer
        b += 2 * tn_ * in_sz               # bias (worst case)
        if use_scratch:
            b += tm_ * tn_ * 4             # f32 accumulator scratch
        return b

    budget = vmem_cap // 2  # leave headroom for Mosaic internal scratch
    while need(tm, tn, tk) > budget and tk > _LANE_MULT:
        tk = max(_LANE_MULT, _round_up(tk // 2, 128))
    while need(tm, tn, tk) > budget and tn > _LANE_MULT:
        tn = max(_LANE_MULT, _round_up(tn // 2, 128))
    while need(tm, tn, tk) > budget and tm > 128:
        tm = max(128, _round_up(tm // 2, sub_mult))

    vmem_limit = int(min(int(0.9 * vmem_cap), max(2 * need(tm, tn, tk), 32 * _MIB)))
    return tm, tn, tk, vmem_limit


def _maybe_pad2(a, rows, cols):
    r, c = a.shape
    if r == rows and c == cols:
        return a
    return jnp.pad(a, ((0, rows - r), (0, cols - c)))


def prepare_linear_weight(weight):
    """One-time layout change: PyTorch (out, in) -> MXU-friendly (in, out)."""
    return jnp.asarray(weight).T


@functools.partial(jax.jit, static_argnames=("tm", "tn", "tk"))
def linear_pallas(x, weight_t, bias=None, *, tm=None, tn=None, tk=None):
    """y = x @ weight_t + bias  (weight_t is (in_features, out_features)).

    Matches torch.nn.Linear semantics when weight_t = W.T.
    """
    in_features, out_features = weight_t.shape
    orig_shape = x.shape
    x2 = x.reshape(-1, in_features)
    M, K = x2.shape
    N = out_features
    has_bias = bias is not None
    out_dtype = x.dtype

    tm, tn, tk, vmem_limit = _resolve_tiles(M, N, K, x.dtype, out_dtype, tm, tn, tk)

    Mp = _round_up(M, tm)
    Np = _round_up(N, tn)
    Kp = _round_up(K, tk)

    # v7x has 2 TensorCores: ensure the "parallel" (i, j) grid has >= 2 tiles
    # when the problem collapsed to a single block (costs one extra grid step).
    sub_mult = _sublane_multiple(x.dtype)
    if (Mp // tm) * (Np // tn) == 1:
        if Np >= 2 * _LANE_MULT and Np % (2 * _LANE_MULT) == 0:
            tn = Np // 2
        elif Mp >= 256 and Mp % (2 * sub_mult) == 0:
            tm = Mp // 2

    grid_m, grid_n, grid_k = Mp // tm, Np // tn, Kp // tk
    grid = (grid_m, grid_n, grid_k)

    # Conditional padding: aligned shapes pass straight through.
    x_p = _maybe_pad2(x2, Mp, Kp)
    w_p = _maybe_pad2(weight_t, Kp, Np)  # (in, out) layout, no transpose in kernel

    operands = [x_p, w_p]
    in_specs = [pl.BlockSpec((tm, tk), lambda i, j, k: (i, k))]

    # Weight block: (tk, tn), contracted on its first dim -> plain MXU matmul.
    w_index_map = lambda i, j, k: (k, j)
    w_spec = pl.BlockSpec((tk, tn), w_index_map)
    if Mp <= 256 and grid_k >= 3:
        # Skinny-M calls are weight-stream (HBM) bound: deepen the weight pipeline.
        try:
            w_spec = pl.BlockSpec((tk, tn), w_index_map, pipeline_mode=pl.Buffered(3))
        except Exception:
            pass  # older JAX: fall back to default double-buffering
    in_specs.append(w_spec)

    if has_bias:
        b_p = _maybe_pad2(bias.reshape(1, N), 1, Np)
        operands.append(b_p)
        in_specs.append(pl.BlockSpec((1, tn), lambda i, j, k: (0, j)))

    acc_into_out = jnp.dtype(out_dtype) == jnp.dtype(jnp.float32)
    scratch_shapes = [] if acc_into_out else [pltpu.VMEM((tm, tn), jnp.float32)]

    in_sz = x_p.dtype.itemsize
    w_sz = w_p.dtype.itemsize
    bytes_accessed = (
        Mp * Kp * grid_n * in_sz          # x re-read once per N block column
        + Kp * Np * grid_m * w_sz         # weight re-read once per M block row
        + Mp * Np * jnp.dtype(out_dtype).itemsize
    )
    if has_bias:
        bytes_accessed += Np * grid_m * b_p.dtype.itemsize
    cost = pl.CostEstimate(
        flops=2 * Mp * Np * Kp,
        transcendentals=0,
        bytes_accessed=int(bytes_accessed),
    )

    out_p = pl.pallas_call(
        _make_kernel(has_bias, acc_into_out),
        out_shape=jax.ShapeDtypeStruct((Mp, Np), out_dtype),
        grid_spec=pltpu.PrefetchScalarGridSpec(
            num_scalar_prefetch=0,
            grid=grid,
            in_specs=in_specs,
            out_specs=pl.BlockSpec((tm, tn), lambda i, j, k: (i, j)),
            scratch_shapes=scratch_shapes,
        ),
        compiler_params=pltpu.CompilerParams(
            dimension_semantics=("parallel", "parallel", "arbitrary"),
            vmem_limit_bytes=vmem_limit,
        ),
        cost_estimate=cost,
    )(*operands)

    out = out_p
    if Mp != M or Np != N:
        out = out_p[:M, :N]
    return out.reshape(orig_shape[:-1] + (N,))


def init_linear_params(key, in_features, out_features, dtype=jnp.float32):
    """Xavier-uniform weight (PyTorch (out, in) layout), zero bias."""
    bound = math.sqrt(6.0 / (in_features + out_features))
    weight = jax.random.uniform(
        key, (out_features, in_features), dtype=dtype, minval=-bound, maxval=bound
    )
    bias = jnp.zeros((out_features,), dtype=dtype)
    return weight, bias


if __name__ == "__main__":
    key = jax.random.PRNGKey(0)
    k_x, k_w = jax.random.split(key)

    batch, seq, in_features, out_features = 2, 8, 32, 64

    x = jax.random.normal(k_x, (batch, seq, in_features), dtype=jnp.float32)
    weight, bias = init_linear_params(k_w, in_features, out_features)
    w_t = prepare_linear_weight(weight)  # one-time (in, out) copy

    # f32 path (accumulates directly in the resident output block)
    y = linear_pallas(x, w_t, bias)
    jax.block_until_ready(y)
    y_ref = x @ weight.T + bias
    assert y.shape == (batch, seq, out_features)
    assert jnp.allclose(y, y_ref, atol=1e-5, rtol=1e-5)

    # bias=False path (bias-free kernel variant, no synthetic zeros)
    y_nb = linear_pallas(x, w_t, None)
    jax.block_until_ready(y_nb)
    assert jnp.allclose(y_nb, x @ weight.T, atol=1e-5, rtol=1e-5)

    # bf16 path (MXU-native operands, f32 accumulation in VMEM scratch)
    y_bf16 = linear_pallas(
        x.astype(jnp.bfloat16),
        w_t.astype(jnp.bfloat16),
        bias.astype(jnp.bfloat16),
    )
    jax.block_until_ready(y_bf16)
    assert y_bf16.shape == (batch, seq, out_features)
    assert jnp.allclose(y_bf16.astype(jnp.float32), y_ref, atol=5e-2, rtol=5e-2)

    print("KERNEL_OK")
</pallas_src>

<mosaic_0001>
module attributes {stable_mosaic.version = 11 : i64} {
  func.func @kernel(%arg0: i32, %arg1: i32, %arg2: i32, %arg3: memref<16x256xf32, #tpu.memory_space<vmem>>, %arg4: memref<256x256xf32, #tpu.memory_space<vmem>>, %arg5: memref<1x256xf32, #tpu.memory_space<vmem>>, %arg6: memref<16x256xf32, #tpu.memory_space<vmem>>) attributes {dimension_semantics = [#tpu.dimension_semantics<parallel>, #tpu.dimension_semantics<parallel>, #tpu.dimension_semantics<arbitrary>], iteration_bounds = array<i64: 1, 1, 1>, scalar_prefetch = 0 : i64, scratch_operands = 0 : i64, tpu.core_type = #tpu.core_type<tc>, window_params = [{transform_indices = @transform_0, window_bounds = array<i64: 16, 256>}, {transform_indices = @transform_1, window_bounds = array<i64: 256, 256>}, {transform_indices = @transform_2, window_bounds = array<i64: 1, 256>}, {transform_indices = @transform_3, window_bounds = array<i64: 16, 256>}]} {
    %c0_i32 = arith.constant 0 : i32
    %0 = arith.cmpi eq, %arg2, %c0_i32 : i32
    %1 = arith.extui %0 : i1 to i32
    %c0_i32_0 = arith.constant 0 : i32
    %2 = arith.cmpi ne, %1, %c0_i32_0 : i32
    scf.if %2 {
      %cst_10 = arith.constant 0.000000e+00 : f32
      %12 = vector.broadcast %cst_10 : f32 to vector<16x256xf32>
      %c0_11 = arith.constant 0 : index
      %c0_12 = arith.constant 0 : index
      %13 = vector.load %arg6[%c0_11, %c0_12] : memref<16x256xf32, #tpu.memory_space<vmem>>, vector<16x256xf32>
      tpu.vector_store %arg6[%c0_11, %c0_12], %12 {strides = array<i32>} : memref<16x256xf32, #tpu.memory_space<vmem>>, vector<16x256xf32>,
    } else {
    }
    %c0 = arith.constant 0 : index
    %c0_1 = arith.constant 0 : index
    %3 = vector.load %arg6[%c0, %c0_1] : memref<16x256xf32, #tpu.memory_space<vmem>>, vector<16x256xf32>
    %c0_2 = arith.constant 0 : index
    %c0_3 = arith.constant 0 : index
    %4 = vector.load %arg3[%c0_2, %c0_3] : memref<16x256xf32, #tpu.memory_space<vmem>>, vector<16x256xf32>
    %c0_4 = arith.constant 0 : index
    %c0_5 = arith.constant 0 : index
    %5 = vector.load %arg4[%c0_4, %c0_5] : memref<256x256xf32, #tpu.memory_space<vmem>>, vector<256x256xf32>
    %cst = arith.constant dense<0.000000e+00> : vector<16x256xf32>
    %6 = tpu.matmul %4, %5, %cst {dimension_numbers = #tpu.dot_dimension_numbers<[1], [0], [0], [1], [0, 0, 1, 1], [], []>} : vector<16x256xf32>, vector<256x256xf32>, vector<16x256xf32> -> vector<16x256xf32>
    %7 = arith.addf %3, %6 : vector<16x256xf32>
    %c0_6 = arith.constant 0 : index
    %c0_7 = arith.constant 0 : index
    %8 = vector.load %arg6[%c0_6, %c0_7] : memref<16x256xf32, #tpu.memory_space<vmem>>, vector<16x256xf32>
    tpu.vector_store %arg6[%c0_6, %c0_7], %7 {strides = array<i32>} : memref<16x256xf32, #tpu.memory_space<vmem>>, vector<16x256xf32>,
    %c0_i32_8 = arith.constant 0 : i32
    %9 = arith.cmpi eq, %arg2, %c0_i32_8 : i32
    %10 = arith.extui %9 : i1 to i32
    %c0_i32_9 = arith.constant 0 : i32
    %11 = arith.cmpi ne, %10, %c0_i32_9 : i32
    scf.if %11 {
      %c0_10 = arith.constant 0 : index
      %c0_11 = arith.constant 0 : index
      %12 = vector.load %arg6[%c0_10, %c0_11] : memref<16x256xf32, #tpu.memory_space<vmem>>, vector<16x256xf32>
      %c0_12 = arith.constant 0 : index
      %c0_13 = arith.constant 0 : index
      %13 = vector.load %arg5[%c0_12, %c0_13] : memref<1x256xf32, #tpu.memory_space<vmem>>, vector<1x256xf32>
      %14 = vector.broadcast %13 : vector<1x256xf32> to vector<16x256xf32>
      %15 = arith.addf %12, %14 : vector<16x256xf32>
      %c0_14 = arith.constant 0 : index
      %c0_15 = arith.constant 0 : index
      %16 = vector.load %arg6[%c0_14, %c0_15] : memref<16x256xf32, #tpu.memory_space<vmem>>, vector<16x256xf32>
      tpu.vector_store %arg6[%c0_14, %c0_15], %15 {strides = array<i32>} : memref<16x256xf32, #tpu.memory_space<vmem>>, vector<16x256xf32>,
    } else {
    }
    return
  }
  func.func @transform_0(%arg0: i32, %arg1: i32, %arg2: i32) -> (i32, i32) {
    %c0_i32 = arith.constant 0 : i32
    return %arg0, %arg2 : i32, i32
  }
  func.func @transform_1(%arg0: i32, %arg1: i32, %arg2: i32) -> (i32, i32) {
    %c0_i32 = arith.constant 0 : i32
    return %arg2, %arg1 : i32, i32
  }
  func.func @transform_2(%arg0: i32, %arg1: i32, %arg2: i32) -> (i32, i32) {
    %c0_i32 = arith.constant 0 : i32
    %c0_i32_0 = arith.constant 0 : i32
    return %c0_i32, %arg1 : i32, i32
  }
  func.func @transform_3(%arg0: i32, %arg1: i32, %arg2: i32) -> (i32, i32) {
    %c0_i32 = arith.constant 0 : i32
    return %arg0, %arg1 : i32, i32
  }
}

</mosaic_0001>

<llo_original>
// kernel: linear_pallas.1
$region0: #{linear_pallas.1}
  #allocation0 [shape = 'u32[]', space=smem, size = 0x4, offset = 0x4, fixed_abs, tag = 'smem constant byte address 0x4 - core index']
  #allocation1 [shape = 'u32[144,128]{1,0:T(1,128)}', space=vmem, size = 0x12000, scoped, tag = 'internal scratch']
  %s0 = inlined_call_operand.vmem [shape: f32[16,256], index: 0, kind: input, shape index: {}]
  %s1 = inlined_call_operand.vmem [shape: f32[256,256], index: 1, kind: input, shape index: {}]
  %s2 = inlined_call_operand.vmem [shape: f32[1,256], index: 2, kind: input, shape index: {}]
  %s3 = inlined_call_operand.vmem [shape: f32[16,256], index: 3, kind: output, shape index: {}]
  %s4 = sld [smem:[#allocation0]]
  $region30: #{linear_pallas.1} parent=0
    _
  %s6 = ssub.s32 1, %s4
  %s7 = scalar_select 0, %s6, %s4
  // Predicated region
  $region2: #{linear_pallas.1} parent=0 // pred_check
    _
  $region3: #{linear_pallas.1} parent=0 // pred_check_branch
    %9 = sbr.rel (0) target = $region5
  $region4: #{linear_pallas.1} parent=0 // pred_region
    _
  $region5: #{linear_pallas.1} parent=0 // pred_fallthru
    _
  // Predicated region
  $region6: #{linear_pallas.1} parent=0 // pred_check
    _
  $region7: #{linear_pallas.1} parent=0 // pred_check_branch
    %11 = sbr.rel (0) target = $region9
  $region8: #{linear_pallas.1} parent=0 // pred_region
    _
  $region9: #{linear_pallas.1} parent=0 // pred_fallthru
    _
  // Predicated region
  $region10: #{linear_pallas.1} parent=0 // pred_check
    _
  $region11: #{linear_pallas.1} parent=0 // pred_check_branch
    %13 = sbr.rel (0) target = $region13
  $region12: #{linear_pallas.1} parent=0 // pred_region
    _
  $region13: #{linear_pallas.1} parent=0 // pred_fallthru
    _
  %p14 = scmp.eq.s32.totalorder 0, 0
  // Predicated region
  $region14: #{linear_pallas.1} parent=0 // pred_check
    %p15 = pneg %p14
  $region15: #{linear_pallas.1} parent=0 // pred_check_branch
    %17 = sbr.rel (%p15) target = $region17
  $region16: #{linear_pallas.1} parent=0 // pred_region
    %18 = vst [vmem:[%s3] sm:$0xff] 0.0
    %19 = vst [vmem:[%s3 + $0x8] sm:$0xff] 0.0
    %20 = vst [vmem:[%s3 + $0x10] sm:$0xff] 0.0
    %21 = vst [vmem:[%s3 + $0x18] sm:$0xff] 0.0
  $region17: #{linear_pallas.1} parent=0 // pred_fallthru
    _
  %v22 = vld [vmem:[%s3] sm:$0xff]
  %v23 = vld [vmem:[%s3 + $0x8] sm:$0xff]
  %v24 = vld [vmem:[%s3 + $0x10] sm:$0xff]
  %v25 = vld [vmem:[%s3 + $0x18] sm:$0xff]
  %v26 = vld [vmem:[%s0] sm:$0xff]
  %v27 = vld [vmem:[%s0 + $0x8] sm:$0xff]
  %v28 = vld [vmem:[%s0 + $0x10] sm:$0xff]
  %v29 = vld [vmem:[%s0 + $0x18] sm:$0xff]
  %v30 = vld [vmem:[%s1] sm:$0xff]
  %v31 = vld [vmem:[%s1 + $0x8] sm:$0xff]
  %v32 = vld [vmem:[%s1 + $0x10] sm:$0xff]
  %v33 = vld [vmem:[%s1 + $0x18] sm:$0xff]
  %v34 = vld [vmem:[%s1 + $0x20] sm:$0xff]
  %v35 = vld [vmem:[%s1 + $0x28] sm:$0xff]
  %v36 = vld [vmem:[%s1 + $0x30] sm:$0xff]
  %v37 = vld [vmem:[%s1 + $0x38] sm:$0xff]
  %v38 = vld [vmem:[%s1 + $0x40] sm:$0xff]
  %v39 = vld [vmem:[%s1 + $0x48] sm:$0xff]
  %v40 = vld [vmem:[%s1 + $0x50] sm:$0xff]
  %v41 = vld [vmem:[%s1 + $0x58] sm:$0xff]
  %v42 = vld [vmem:[%s1 + $0x60] sm:$0xff]
  %v43 = vld [vmem:[%s1 + $0x68] sm:$0xff]
  %v44 = vld [vmem:[%s1 + $0x70] sm:$0xff]
  %v45 = vld [vmem:[%s1 + $0x78] sm:$0xff]
  %v46 = vld [vmem:[%s1 + $0x80] sm:$0xff]
  %v47 = vld [vmem:[%s1 + $0x88] sm:$0xff]
  %v48 = vld [vmem:[%s1 + $0x90] sm:$0xff]
  %v49 = vld [vmem:[%s1 + $0x98] sm:$0xff]
  %v50 = vld [vmem:[%s1 + $0xa0] sm:$0xff]
  %v51 = vld [vmem:[%s1 + $0xa8] sm:$0xff]
  %v52 = vld [vmem:[%s1 + $0xb0] sm:$0xff]
  %v53 = vld [vmem:[%s1 + $0xb8] sm:$0xff]
  %v54 = vld [vmem:[%s1 + $0xc0] sm:$0xff]
  %v55 = vld [vmem:[%s1 + $0xc8] sm:$0xff]
  %v56 = vld [vmem:[%s1 + $0xd0] sm:$0xff]
  %v57 = vld [vmem:[%s1 + $0xd8] sm:$0xff]
  %v58 = vld [vmem:[%s1 + $0xe0] sm:$0xff]
  %v59 = vld [vmem:[%s1 + $0xe8] sm:$0xff]
  %v60 = vld [vmem:[%s1 + $0xf0] sm:$0xff]
  %v61 = vld [vmem:[%s1 + $0xf8] sm:$0xff]
  %v62 = vld [vmem:[%s1 + $0x100] sm:$0xff]
  %v63 = vld [vmem:[%s1 + $0x108] sm:$0xff]
  %v64 = vld [vmem:[%s1 + $0x110] sm:$0xff]
  %v65 = vld [vmem:[%s1 + $0x118] sm:$0xff]
  %v66 = vld [vmem:[%s1 + $0x120] sm:$0xff]
  %v67 = vld [vmem:[%s1 + $0x128] sm:$0xff]
  %v68 = vld [vmem:[%s1 + $0x130] sm:$0xff]
  %v69 = vld [vmem:[%s1 + $0x138] sm:$0xff]
  %v70 = vld [vmem:[%s1 + $0x140] sm:$0xff]
  %v71 = vld [vmem:[%s1 + $0x148] sm:$0xff]
  %v72 = vld [vmem:[%s1 + $0x150] sm:$0xff]
  %v73 = vld [vmem:[%s1 + $0x158] sm:$0xff]
  %v74 = vld [vmem:[%s1 + $0x160] sm:$0xff]
  %v75 = vld [vmem:[%s1 + $0x168] sm:$0xff]
  %v76 = vld [vmem:[%s1 + $0x170] sm:$0xff]
  %v77 = vld [vmem:[%s1 + $0x178] sm:$0xff]
  %v78 = vld [vmem:[%s1 + $0x180] sm:$0xff]
  %v79 = vld [vmem:[%s1 + $0x188] sm:$0xff]
  %v80 = vld [vmem:[%s1 + $0x190] sm:$0xff]
  %v81 = vld [vmem:[%s1 + $0x198] sm:$0xff]
  %v82 = vld [vmem:[%s1 + $0x1a0] sm:$0xff]
  %v83 = vld [vmem:[%s1 + $0x1a8] sm:$0xff]
  %v84 = vld [vmem:[%s1 + $0x1b0] sm:$0xff]
  %v85 = vld [vmem:[%s1 + $0x1b8] sm:$0xff]
  %v86 = vld [vmem:[%s1 + $0x1c0] sm:$0xff]
  %v87 = vld [vmem:[%s1 + $0x1c8] sm:$0xff]
  %v88 = vld [vmem:[%s1 + $0x1d0] sm:$0xff]
  %v89 = vld [vmem:[%s1 + $0x1d8] sm:$0xff]
  %v90 = vld [vmem:[%s1 + $0x1e0] sm:$0xff]
  %v91 = vld [vmem:[%s1 + $0x1e8] sm:$0xff]
  %v92 = vld [vmem:[%s1 + $0x1f0] sm:$0xff]
  %v93 = vld [vmem:[%s1 + $0x1f8] sm:$0xff]
  %94 = vmatprep.subr.mxu0 %v31
  %95 = vmatpush1.msra.mxu0 %v30
  %96 = vmatprep.subr.mxu0 %v33
  %97 = vmatpush1.msra.mxu0 %v32
  %98 = vmatprep.subr.mxu0 %v35
  %99 = vmatpush1.msra.mxu0 %v34
  %100 = vmatprep.subr.mxu0 %v37
  %101 = vmatpush1.msra.mxu0 %v36
  %102 = vmatprep.subr.mxu0 %v39
  %103 = vmatpush1.msra.mxu0 %v38
  %104 = vmatprep.subr.mxu0 %v41
  %105 = vmatpush1.msra.mxu0 %v40
  %106 = vmatprep.subr.mxu0 %v43
  %107 = vmatpush1.msra.mxu0 %v42
  %108 = vmatprep.subr.mxu0 %v45
  %109 = vmatpush1.msra.mxu0 %v44
  %110 = vmatprep.subr.mxu0 %v47
  %111 = vmatpush1.msra.mxu0 %v46
  %112 = vmatprep.subr.mxu0 %v49
  %113 = vmatpush1.msra.mxu0 %v48
  %114 = vmatprep.subr.mxu0 %v51
  %115 = vmatpush1.msra.mxu0 %v50
  %116 = vmatprep.subr.mxu0 %v53
  %117 = vmatpush1.msra.mxu0 %v52
  %118 = vmatprep.subr.mxu0 %v55
  %119 = vmatpush1.msra.mxu0 %v54
  %120 = vmatprep.subr.mxu0 %v57
  %121 = vmatpush1.msra.mxu0 %v56
  %122 = vmatprep.subr.mxu0 %v59
  %123 = vmatpush1.msra.mxu0 %v58
  %124 = vmatprep.subr.mxu0 %v61
  %125 = vmatpush1.msra.mxu0 %v60
  %126 = vmatprep.subr.mxu0 %v63
  %127 = vmatpush1.msra.mxu0 %v62
  %128 = vmatprep.subr.mxu0 %v65
  %129 = vmatpush1.msra.mxu0 %v64
  %130 = vmatprep.subr.mxu0 %v67
  %131 = vmatpush1.msra.mxu0 %v66
  %132 = vmatprep.subr.mxu0 %v69
  %133 = vmatpush1.msra.mxu0 %v68
  %134 = vmatprep.subr.mxu0 %v71
  %135 = vmatpush1.msra.mxu0 %v70
  %136 = vmatprep.subr.mxu0 %v73
  %137 = vmatpush1.msra.mxu0 %v72
  %138 = vmatprep.subr.mxu0 %v75
  %139 = vmatpush1.msra.mxu0 %v74
  %140 = vmatprep.subr.mxu0 %v77
  %141 = vmatpush1.msra.mxu0 %v76
  %142 = vmatprep.subr.mxu0 %v79
  %143 = vmatpush1.msra.mxu0 %v78
  %144 = vmatprep.subr.mxu0 %v81
  %145 = vmatpush1.msra.mxu0 %v80
  %146 = vmatprep.subr.mxu0 %v83
  %147 = vmatpush1.msra.mxu0 %v82
  %148 = vmatprep.subr.mxu0 %v85
  %149 = vmatpush1.msra.mxu0 %v84
  %150 = vmatprep.subr.mxu0 %v87
  %151 = vmatpush1.msra.mxu0 %v86
  %152 = vmatprep.subr.mxu0 %v89
  %153 = vmatpush1.msra.mxu0 %v88
  %154 = vmatprep.subr.mxu0 %v91
  %155 = vmatpush1.msra.mxu0 %v90
  %156 = vmatprep.subr.mxu0 %v93
  %157 = vmatpush1.msra.mxu0 %v92
  %158 = vmatprep.mubr.f32.mxu0 %v27
  %159 = vmatmul.mubr.f32.gmra.mrb[0].mxu0 %v26
  %v160 = vpop.f32.mrb[0].mxu0
  %v161 = vadd.f32 0.0, %v160
  %v162 = vpop.f32.mrb[0].mxu0
  %v163 = vadd.f32 0.0, %v162
  %164 = vmatprep.mubr.f32.mxu0 %v29
  %165 = vmatmul.mubr.f32.gmra.mrb[0].mxu0 %v28
  %v166 = vpop.f32.mrb[0].mxu0
  %v167 = vadd.f32 0.0, %v166
  %v168 = vpop.f32.mrb[0].mxu0
  %v169 = vadd.f32 0.0, %v168
  %170 = vdwg.mxu0
  %v171 = vadd.f32 %v22, %v161
  %v172 = vadd.f32 %v23, %v163
  %v173 = vadd.f32 %v24, %v167
  %v174 = vadd.f32 %v25, %v169
  %175 = vst [vmem:[%s3] sm:$0xff] %v171
  %176 = vst [vmem:[%s3 + $0x8] sm:$0xff] %v172
  %177 = vst [vmem:[%s3 + $0x10] sm:$0xff] %v173
  %178 = vst [vmem:[%s3 + $0x18] sm:$0xff] %v174
  // Predicated region
  $region18: #{linear_pallas.1} parent=0 // pred_check
    %p179 = pneg %p14
  $region19: #{linear_pallas.1} parent=0 // pred_check_branch
    %181 = sbr.rel (%p179) target = $region21
  $region20: #{linear_pallas.1} parent=0 // pred_region
    %v182 = vld [vmem:[%s3] sm:$0xff]
    %v183 = vld [vmem:[%s3 + $0x8] sm:$0xff]
    %v184 = vld [vmem:[%s3 + $0x10] sm:$0xff]
    %v185 = vld [vmem:[%s3 + $0x18] sm:$0xff]
    %v186 = vld [vmem:[%s2] sm:$0x3]
    %v188 = vlaneseq
    %v189 = vshrl.u32 %v188, 7
    %v190 = vsub.s32 0, %v189
    %v191 = vrot.slane %v186, %v190
    %v192 = vlaneseq
    %v193 = vshrl.u32 %v192, 7
    %v194 = vsub.s32 1, %v193
    %v195 = vrot.slane %v186, %v194
    %v198 = vadd.f32 %v182, %v191
    %v199 = vadd.f32 %v183, %v195
    %v200 = vadd.f32 %v184, %v191
    %v201 = vadd.f32 %v185, %v195
    %202 = vst [vmem:[%s3] sm:$0xff] %v198
    %203 = vst [vmem:[%s3 + $0x8] sm:$0xff] %v199
    %204 = vst [vmem:[%s3 + $0x10] sm:$0xff] %v200
    %205 = vst [vmem:[%s3 + $0x18] sm:$0xff] %v201
  $region21: #{linear_pallas.1} parent=0 // pred_fallthru
    _
  // Predicated region
  $region22: #{linear_pallas.1} parent=0 // pred_check
    _
  $region23: #{linear_pallas.1} parent=0 // pred_check_branch
    %207 = sbr.rel (0) target = $region25
  $region24: #{linear_pallas.1} parent=0 // pred_region
    _
  $region25: #{linear_pallas.1} parent=0 // pred_fallthru
    _
  // Predicated region
  $region26: #{linear_pallas.1} parent=0 // pred_check
    _
  $region27: #{linear_pallas.1} parent=0 // pred_check_branch
    %209 = sbr.rel (0) target = $region29
  $region28: #{linear_pallas.1} parent=0 // pred_region
    _
  $region29: #{linear_pallas.1} parent=0 // pred_fallthru
    _

</llo_original>
